<compile_context>
chip_gen: v6e
topology: v6e:2x2x1
jax: 0.10.0
libtpu: 0.0.40
codegen_flags: <defaults>
</compile_context>

<pallas_src>
import functools

import jax
import jax.numpy as jnp
from jax.experimental import pallas as pl
from jax.experimental.pallas import tpu as pltpu


def _se_kernel(x_ref, w1_ref, w2_ref, o_ref, *, inv_hw):
    # x_ref:  (1, C, HW_pad) block for one batch element (native dtype)
    # w1_ref: (C//r, C)  fc1.weight (PyTorch (out, in) layout), f32, resident
    # w2_ref: (C, C//r)  fc2.weight (PyTorch (out, in) layout), f32, resident
    x = x_ref[0]                                           # (C, HW_pad)

    # Squeeze: spatial sum on the MXU (dot with a ones column, f32 accumulate),
    # then scale by 1/(true H*W) -> global average pool. Zero padding along the
    # spatial axis contributes nothing to the sum.
    ones_col = jnp.ones((x.shape[-1], 1), dtype=x.dtype)
    pooled = jnp.dot(x, ones_col, preferred_element_type=jnp.float32) * inv_hw  # (C, 1)

    # Excitation: s = sigmoid(W2 @ relu(W1 @ pooled))   (all f32, tiny)
    h = jnp.maximum(
        jnp.dot(w1_ref[...], pooled, preferred_element_type=jnp.float32), 0.0)  # (C//r, 1)
    s = jax.nn.sigmoid(
        jnp.dot(w2_ref[...], h, preferred_element_type=jnp.float32))            # (C, 1)

    # Scale: broadcast the per-channel gate over the lane (spatial) axis in the
    # input dtype — no full-tensor f32 copy of x.
    o_ref[0] = (x * s.astype(x.dtype)).astype(o_ref.dtype)


def se_block(x_nchw, w1, w2):
    """x_nchw: (B, C, H, W); w1: (C//r, C); w2: (C, C//r) (PyTorch nn.Linear layout)."""
    b, c, h, w = x_nchw.shape
    hw = h * w
    hw_pad = pl.cdiv(hw, 128) * 128            # lane-dense last dim for unmasked stores

    x_flat = x_nchw.reshape(b, c, hw)
    if hw_pad != hw:
        x_flat = jnp.pad(x_flat, ((0, 0), (0, 0), (0, hw_pad - hw)))

    w1f = w1.astype(jnp.float32)
    w2f = w2.astype(jnp.float32)

    kernel = functools.partial(_se_kernel, inv_hw=1.0 / hw)

    out_flat = pl.pallas_call(
        kernel,
        out_shape=jax.ShapeDtypeStruct((b, c, hw_pad), x_nchw.dtype),
        grid=(b,),
        in_specs=[
            pl.BlockSpec((1, c, hw_pad), lambda i: (i, 0, 0)),   # one batch slab / step
            pl.BlockSpec(w1f.shape, lambda i: (0, 0)),           # resident across steps
            pl.BlockSpec(w2f.shape, lambda i: (0, 0)),           # resident across steps
        ],
        out_specs=pl.BlockSpec((1, c, hw_pad), lambda i: (i, 0, 0)),
        compiler_params=pltpu.CompilerParams(
            dimension_semantics=("parallel",)),                  # megacore-shard batch
    )(x_flat, w1f, w2f)

    if hw_pad != hw:
        out_flat = out_flat[:, :, :hw]
    return out_flat.reshape(b, c, h, w)


def se_block_ref(x, w1, w2):
    """Pure-JAX reference mirroring the PyTorch forward."""
    pooled = jnp.mean(x.astype(jnp.float32), axis=(2, 3))      # (B, C)
    h = jnp.maximum(pooled @ w1.T, 0.0)                        # (B, C//r)
    s = jax.nn.sigmoid(h @ w2.T)                               # (B, C)
    return (x.astype(jnp.float32) * s[:, :, None, None]).astype(x.dtype)


if __name__ == "__main__":
    B, C, H, W = 2, 32, 16, 16
    reduction = 16
    hidden = C // reduction

    key = jax.random.PRNGKey(0)
    kx, k1, k2 = jax.random.split(key, 3)

    x = jax.random.normal(kx, (B, C, H, W), dtype=jnp.float32)
    # Deterministic synthetic weights (PyTorch nn.Linear layout: (out, in))
    w1 = jax.random.normal(k1, (hidden, C), dtype=jnp.float32) * 0.1
    w2 = jax.random.normal(k2, (C, hidden), dtype=jnp.float32) * 0.1

    out = se_block(x, w1, w2)
    out = jax.block_until_ready(out)

    ref = se_block_ref(x, w1, w2)
    assert out.shape == (B, C, H, W)
    assert jnp.allclose(out, ref, atol=1e-5, rtol=1e-5)

    print("KERNEL_OK")
</pallas_src>

<mosaic_0001>
module attributes {stable_mosaic.version = 11 : i64} {
  func.func @_se_kernel(%arg0: i32, %arg1: memref<1x32x256xf32, #tpu.memory_space<vmem>>, %arg2: memref<2x32xf32, #tpu.memory_space<vmem>>, %arg3: memref<32x2xf32, #tpu.memory_space<vmem>>, %arg4: memref<1x32x256xf32, #tpu.memory_space<vmem>>) attributes {dimension_semantics = [#tpu.dimension_semantics<parallel>], iteration_bounds = array<i64: 2>, scalar_prefetch = 0 : i64, scratch_operands = 0 : i64, tpu.core_type = #tpu.core_type<tc>, window_params = [{transform_indices = @transform_0, window_bounds = array<i64: 1, 32, 256>}, {pipeline_mode = #tpu.pipeline_mode<synchronous>, transform_indices = @transform_1, window_bounds = array<i64: 2, 32>}, {pipeline_mode = #tpu.pipeline_mode<synchronous>, transform_indices = @transform_2, window_bounds = array<i64: 32, 2>}, {transform_indices = @transform_3, window_bounds = array<i64: 1, 32, 256>}]} {
    %c0 = arith.constant 0 : index
    %c0_0 = arith.constant 0 : index
    %c0_1 = arith.constant 0 : index
    %0 = vector.load %arg1[%c0, %c0_0, %c0_1] : memref<1x32x256xf32, #tpu.memory_space<vmem>>, vector<1x32x256xf32>
    %1 = vector.shape_cast %0 : vector<1x32x256xf32> to vector<32x256xf32>
    %cst = arith.constant 1.000000e+00 : f32
    %2 = vector.broadcast %cst : f32 to vector<256x1xf32>
    %cst_2 = arith.constant dense<0.000000e+00> : vector<32x1xf32>
    %3 = tpu.matmul %1, %2, %cst_2 {dimension_numbers = #tpu.dot_dimension_numbers<[1], [0], [0], [1], [0, 0, 1, 1], [], []>} : vector<32x256xf32>, vector<256x1xf32>, vector<32x1xf32> -> vector<32x1xf32>
    %cst_3 = arith.constant 3.906250e-03 : f32
    %4 = vector.broadcast %cst_3 : f32 to vector<32x1xf32>
    %5 = arith.mulf %3, %4 : vector<32x1xf32>
    %c0_4 = arith.constant 0 : index
    %c0_5 = arith.constant 0 : index
    %6 = vector.load %arg2[%c0_4, %c0_5] : memref<2x32xf32, #tpu.memory_space<vmem>>, vector<2x32xf32>
    %cst_6 = arith.constant dense<0.000000e+00> : vector<2x1xf32>
    %7 = tpu.matmul %6, %5, %cst_6 {dimension_numbers = #tpu.dot_dimension_numbers<[1], [0], [0], [1], [0, 0, 1, 1], [], []>} : vector<2x32xf32>, vector<32x1xf32>, vector<2x1xf32> -> vector<2x1xf32>
    %cst_7 = arith.constant 0.000000e+00 : f32
    %8 = vector.broadcast %cst_7 : f32 to vector<2x1xf32>
    %9 = arith.maximumf %7, %8 : vector<2x1xf32>
    %c0_8 = arith.constant 0 : index
    %c0_9 = arith.constant 0 : index
    %10 = vector.load %arg3[%c0_8, %c0_9] : memref<32x2xf32, #tpu.memory_space<vmem>>, vector<32x2xf32>
    %cst_10 = arith.constant dense<0.000000e+00> : vector<32x1xf32>
    %11 = tpu.matmul %10, %9, %cst_10 {dimension_numbers = #tpu.dot_dimension_numbers<[1], [0], [0], [1], [0, 0, 1, 1], [], []>} : vector<32x2xf32>, vector<2x1xf32>, vector<32x1xf32> -> vector<32x1xf32>
    %12 = arith.negf %11 : vector<32x1xf32>
    %13 = math.exp %12 : vector<32x1xf32>
    %cst_11 = arith.constant 1.000000e+00 : f32
    %14 = vector.broadcast %cst_11 : f32 to vector<32x1xf32>
    %15 = arith.addf %14, %13 : vector<32x1xf32>
    %16 = arith.divf %14, %15 : vector<32x1xf32>
    %17 = vector.broadcast %16 : vector<32x1xf32> to vector<32x256xf32>
    %18 = arith.mulf %1, %17 : vector<32x256xf32>
    %c0_12 = arith.constant 0 : index
    %c0_13 = arith.constant 0 : index
    %c0_14 = arith.constant 0 : index
    %19 = vector.load %arg4[%c0_12, %c0_13, %c0_14] : memref<1x32x256xf32, #tpu.memory_space<vmem>>, vector<1x32x256xf32>
    %20 = vector.shape_cast %19 : vector<1x32x256xf32> to vector<32x256xf32>
    %21 = vector.shape_cast %18 : vector<32x256xf32> to vector<1x32x256xf32>
    tpu.vector_store %arg4[%c0_12, %c0_13, %c0_14], %21 {strides = array<i32>} : memref<1x32x256xf32, #tpu.memory_space<vmem>>, vector<1x32x256xf32>,
    return
  }
  func.func @transform_0(%arg0: i32) -> (i32, i32, i32) {
    %c0_i32 = arith.constant 0 : i32
    %c0_i32_0 = arith.constant 0 : i32
    %c0_i32_1 = arith.constant 0 : i32
    return %arg0, %c0_i32, %c0_i32_0 : i32, i32, i32
  }
  func.func @transform_1(%arg0: i32) -> (i32, i32) {
    %c0_i32 = arith.constant 0 : i32
    %c0_i32_0 = arith.constant 0 : i32
    %c0_i32_1 = arith.constant 0 : i32
    return %c0_i32, %c0_i32_0 : i32, i32
  }
  func.func @transform_2(%arg0: i32) -> (i32, i32) {
    %c0_i32 = arith.constant 0 : i32
    %c0_i32_0 = arith.constant 0 : i32
    %c0_i32_1 = arith.constant 0 : i32
    return %c0_i32, %c0_i32_0 : i32, i32
  }
  func.func @transform_3(%arg0: i32) -> (i32, i32, i32) {
    %c0_i32 = arith.constant 0 : i32
    %c0_i32_0 = arith.constant 0 : i32
    %c0_i32_1 = arith.constant 0 : i32
    return %arg0, %c0_i32, %c0_i32_0 : i32, i32, i32
  }
}

</mosaic_0001>

<llo_original>
// kernel: tpu_custom_call.1
$region0: #{tpu_custom_call.1}
  #allocation0 [shape = 'u32[]', space=smem, size = 0x4, offset = 0x4, fixed_abs, tag = 'smem constant byte address 0x4 - core index']
  #allocation1 [shape = 'u32[144,128]{1,0:T(1,128)}', space=vmem, size = 0x12000, scoped, tag = 'internal scratch']
  %s0 = inlined_call_operand.hbm [shape: f32[2,32,256], index: 0, kind: input, shape index: {}]
  %s1 = inlined_call_operand.vmem [shape: f32[2,32], index: 1, kind: input, shape index: {}]
  %s2 = inlined_call_operand.vmem [shape: f32[32,2], index: 2, kind: input, shape index: {}]
  %s3 = inlined_call_operand.hbm [shape: f32[2,32,256], index: 3, kind: output, shape index: {}]
  %s4 = sld [smem:[#allocation0]]
  $region49: #{tpu_custom_call.1} parent=0
    _
  %s6 = ssub.s32 1, %s4
  %s7 = scalar_select 0, %s6, %s4
  $region1: #{tpu_custom_call.1} parent=0
    #allocation2 [shape = 'u8[65536]{0}', space=vmem, size = 0x10000, scoped, tag = 'input window, operand 0']
    #allocation3 [shape = 's32[2]{0}', space=sflag, size = 0x8, scoped, tag = 'scoped memory for tpu_custom_call.1']
    #allocation4 [shape = 's32[2]{0}', space=sflag, size = 0x8, scoped, tag = 'scoped memory for tpu_custom_call.1']
    #allocation5 [shape = 'u8[65536]{0}', space=vmem, size = 0x10000, scoped, tag = 'output window, operand 0']
    %8 = vsyncpa [#allocation3], 0
    %s9 = scalar_lea.sflag [#allocation3], 1
    %10 = vsyncpa %s9, 0
    %11 = vsyncpa [#allocation4], 0
    %s12 = scalar_lea.sflag [#allocation4], 1
    %13 = vsyncpa %s12, 0
    loop: start=0, step=1, limit=4
    $region2: #{tpu_custom_call.1} parent=1 // loop_pre_header
      _
    $region3: #{tpu_custom_call.1} parent=1 // loop_header
      %s15 = sphi 0, %s19
      %p16 = scmp.ge.s32.totalorder %s15, 4
      %s25 = sphi 0, %s27
      %s28 = sphi 0, %s25
      %s29 = sphi 0, %s28
      %s45 = sphi 0, %s29
      %s49 = sphi 0, %s49
      %s51 = sphi 0, %s49
      %s52 = sphi 0, %s51
      %s66 = sphi 0, %s52
      %s70 = sphi 0, %s70
      %s72 = sphi 0, %s70
      %s73 = sphi 0, %s72
      %s87 = sphi 0, %s73
      %s93 = sphi 0, %s95
      %s96 = sphi 0, %s93
      %s97 = sphi 0, %s96
      %s113 = sphi 0, %s97
    $region4: #{tpu_custom_call.1} parent=1 // loop_header_branch
      %18 = sbr.rel (%p16) target = $region8
    $region5: #{tpu_custom_call.1} parent=1 // loop_body
      %s20 = ssub.s32 %s15, 1
      %s21 = ssub.s32 %s15, 2
      %s22 = sadd.s32 %s15, 1
      %s23 = ssub.s32 %s15, %s22
      %p24 = scmp.eq.s32.totalorder %s23, 0
      %s26 = sadd.s32 %s25, 1
      %s27 = scalar_select %p24, %s25, %s26
      %p30 = pneg %p24
      %p31 = scmp.eq.s32.totalorder %s15, 1
      %p32 = por %p30, %p31
      %p33 = scmp.ne.s32.totalorder %s25, %s28
      %p34 = scmp.eq.s32.totalorder %s15, 0
      %p35 = por %p33, %p34
      %p36 = scmp.ne.s32.totalorder %s25, %s28
      %p37 = scmp.eq.s32.totalorder %s20, 1
      %p38 = por %p36, %p37
      %p39 = scmp.ne.s32.totalorder %s28, %s29
      %p40 = scmp.eq.s32.totalorder %s20, 0
      %p41 = por %p39, %p40
      %p42 = scmp.ne.s32.totalorder %s28, %s29
      %p43 = scmp.eq.s32.totalorder %s21, 1
      %p44 = por %p42, %p43
      %p46 = scmp.ne.s32.totalorder %s29, %s45
      %p47 = scmp.eq.s32.totalorder %s21, 0
      %p48 = por %p46, %p47
      %s50 = sadd.s32 %s49, 1
      %p53 = scmp.eq.s32.totalorder %s15, 1
      %p54 = scmp.ne.s32.totalorder %s49, %s51
      %p55 = scmp.eq.s32.totalorder %s15, 0
      %p56 = por %p54, %p55
      %p57 = scmp.ne.s32.totalorder %s49, %s51
      %p58 = scmp.eq.s32.totalorder %s20, 1
      %p59 = por %p57, %p58
      %p60 = scmp.ne.s32.totalorder %s51, %s52
      %p61 = scmp.eq.s32.totalorder %s20, 0
      %p62 = por %p60, %p61
      %p63 = scmp.ne.s32.totalorder %s51, %s52
      %p64 = scmp.eq.s32.totalorder %s21, 1
      %p65 = por %p63, %p64
      %p67 = scmp.ne.s32.totalorder %s52, %s66
      %p68 = scmp.eq.s32.totalorder %s21, 0
      %p69 = por %p67, %p68
      %s71 = sadd.s32 %s70, 1
      %p74 = scmp.eq.s32.totalorder %s15, 1
      %p75 = scmp.ne.s32.totalorder %s70, %s72
      %p76 = scmp.eq.s32.totalorder %s15, 0
      %p77 = por %p75, %p76
      %p78 = scmp.ne.s32.totalorder %s70, %s72
      %p79 = scmp.eq.s32.totalorder %s20, 1
      %p80 = por %p78, %p79
      %p81 = scmp.ne.s32.totalorder %s72, %s73
      %p82 = scmp.eq.s32.totalorder %s20, 0
      %p83 = por %p81, %p82
      %p84 = scmp.ne.s32.totalorder %s72, %s73
      %p85 = scmp.eq.s32.totalorder %s21, 1
      %p86 = por %p84, %p85
      %p88 = scmp.ne.s32.totalorder %s73, %s87
      %p89 = scmp.eq.s32.totalorder %s21, 0
      %p90 = por %p88, %p89
      %s91 = ssub.s32 %s15, %s22
      %p92 = scmp.eq.s32.totalorder %s91, 0
      %s94 = sadd.s32 %s93, 1
      %s95 = scalar_select %p92, %s93, %s94
      %p98 = pneg %p92
      %p99 = scmp.eq.s32.totalorder %s15, 1
      %p100 = por %p98, %p99
      %p101 = scmp.ne.s32.totalorder %s93, %s96
      %p102 = scmp.eq.s32.totalorder %s15, 0
      %p103 = por %p101, %p102
      %p104 = scmp.ne.s32.totalorder %s93, %s96
      %p105 = scmp.eq.s32.totalorder %s20, 1
      %p106 = por %p104, %p105
      %p107 = scmp.ne.s32.totalorder %s96, %s97
      %p108 = scmp.eq.s32.totalorder %s20, 0
      %p109 = por %p107, %p108
      %p110 = scmp.ne.s32.totalorder %s96, %s97
      %p111 = scmp.eq.s32.totalorder %s21, 1
      %p112 = por %p110, %p111
      %p114 = scmp.ne.s32.totalorder %s97, %s113
      %p115 = scmp.eq.s32.totalorder %s21, 0
      %p116 = por %p114, %p115
      %p117 = scmp.le.s32.totalorder 1, %s15
      %p118 = scmp.lt.s32.totalorder %s15, 3
      %p119 = pnand %p117, %p118
      %p120 = pneg %p119
      // Predicated region
      $region9: #{tpu_custom_call.1} parent=5 // pred_check
        _
      $region10: #{tpu_custom_call.1} parent=5 // pred_check_branch
        %122 = sbr.rel (%p119) target = $region12
      $region11: #{tpu_custom_call.1} parent=5 // pred_region
        %s123 = ssub.s32 %s15, 1
        // Predicated region
        $region13: #{tpu_custom_call.1} parent=11 // pred_check
          %p124 = pneg %p62
        $region14: #{tpu_custom_call.1} parent=11 // pred_check_branch
          %126 = sbr.rel (%p124) target = $region16
        $region15: #{tpu_custom_call.1} parent=11 // pred_region
          _
        $region16: #{tpu_custom_call.1} parent=11 // pred_fallthru
          _
        // Predicated region
        $region17: #{tpu_custom_call.1} parent=11 // pred_check
          %p127 = pneg %p83
        $region18: #{tpu_custom_call.1} parent=11 // pred_check_branch
          %129 = sbr.rel (%p127) target = $region20
        $region19: #{tpu_custom_call.1} parent=11 // pred_region
          _
        $region20: #{tpu_custom_call.1} parent=11 // pred_fallthru
          _
      $region12: #{tpu_custom_call.1} parent=5 // pred_fallthru
        _
      %p130 = scmp.lt.s32.totalorder %s15, 2
      // Predicated region
      $region21: #{tpu_custom_call.1} parent=5 // pred_check
        %p131 = pneg %p130
      $region22: #{tpu_custom_call.1} parent=5 // pred_check_branch
        %133 = sbr.rel (%p131) target = $region24
      $region23: #{tpu_custom_call.1} parent=5 // pred_region
        // Predicated region
        $region25: #{tpu_custom_call.1} parent=23 // pred_check
          %p134 = pneg %p35
        $region26: #{tpu_custom_call.1} parent=23 // pred_check_branch
          %136 = sbr.rel (%p134) target = $region28
        $region27: #{tpu_custom_call.1} parent=23 // pred_region
          %s137 = sand.u32 %s25, 1
          %s138 = scalar_lea.sflag [#allocation3], %s137
          %s139 = sand.u32 %s25, 1
          %s140 = smul.addr %s139, 64
          %s141 = scalar_lea.vmem [#allocation2], %s140
          %s143 = ssub.s32 1024, 1024
          %144 = vsyncadd %s138, %s143
          %s145 = smul.addr %s15, 8
          %s146 = smul.addr %s145, 128
          %s147 = scalar_lea.hbm %s0, %s146
          %s148 = sshll.u32 %s141, 4
          %s149 = int_to_ptr.vmem [resolvable:$true] %s148
          %154 = dma.hbm_to_vmem [thread:$0]  %s147, 1024, %s149, %s138, 256, 256, 16
        $region28: #{tpu_custom_call.1} parent=23 // pred_fallthru
          _
      $region24: #{tpu_custom_call.1} parent=5 // pred_fallthru
        _
      %p155 = scmp.le.s32.totalorder 1, %s15
      %p156 = scmp.lt.s32.totalorder %s15, 3
      %p157 = pnand %p155, %p156
      %p158 = pneg %p157
      // Predicated region
      $region29: #{tpu_custom_call.1} parent=5 // pred_check
        _
      $region30: #{tpu_custom_call.1} parent=5 // pred_check_branch
        %160 = sbr.rel (%p157) target = $region32
      $region31: #{tpu_custom_call.1} parent=5 // pred_region
        %s161 = ssub.s32 %s15, 1
        %s162 = sand.u32 %s28, 1
        %s163 = scalar_lea.sflag [#allocation3], %s162
        %s164 = sand.u32 %s28, 1
        %s165 = smul.addr %s164, 64
        %s166 = scalar_lea.vmem [#allocation2], %s165
        // Predicated region
        $region33: #{tpu_custom_call.1} parent=31 // pred_check
          %p167 = pneg %p41
        $region34: #{tpu_custom_call.1} parent=31 // pred_check_branch
          %169 = sbr.rel (%p167) target = $region36
        $region35: #{tpu_custom_call.1} parent=31 // pred_region
          %170 = dma.done %s163, 1024
        $region36: #{tpu_custom_call.1} parent=31 // pred_fallthru
          _
        %s171 = sand.u32 %s28, 1
        %s172 = scalar_lea.sflag [#allocation3], %s171
        %s173 = sand.u32 %s28, 1
        %s174 = smul.addr %s173, 64
        %s175 = scalar_lea.vmem [#allocation2], %s174
        %p176 = pneg %p41
        %p177 = pneg %p38
        %p178 = pneg %p62
        %p179 = pneg %p59
        %p180 = pneg %p83
        %p181 = pneg %p80
        %p182 = pneg %p109
        %p183 = pneg %p106
        %s184 = sand.u32 %s96, 1
        %s185 = scalar_lea.sflag [#allocation4], %s184
        %s186 = sand.u32 %s96, 1
        %s187 = smul.addr %s186, 64
        %s188 = scalar_lea.vmem [#allocation5], %s187
        %v189 = vld [vmem:[%s166] sm:$0xff]
        %v190 = vld [vmem:[%s166 + $0x8] sm:$0xff]
        %v191 = vld [vmem:[%s166 + $0x10] sm:$0xff]
        %v192 = vld [vmem:[%s166 + $0x18] sm:$0xff]
        %v193 = vld [vmem:[%s166 + $0x20] sm:$0xff]
        %v194 = vld [vmem:[%s166 + $0x28] sm:$0xff]
        %v195 = vld [vmem:[%s166 + $0x30] sm:$0xff]
        %v196 = vld [vmem:[%s166 + $0x38] sm:$0xff]
        %197 = vmatprep.subr.mxu0 0.0
        %198 = vmatpush1.msra.mxu0 1.0
        %199 = vmatprep.subr.mxu0 0.0
        %200 = vmatpush1.msra.mxu0 1.0
        %201 = vmatprep.subr.mxu0 0.0
        %202 = vmatpush1.msra.mxu0 1.0
        %203 = vmatprep.subr.mxu0 0.0
        %204 = vmatpush1.msra.mxu0 1.0
        %205 = vmatprep.subr.mxu0 0.0
        %206 = vmatpush1.msra.mxu0 1.0
        %207 = vmatprep.subr.mxu0 0.0
        %208 = vmatpush1.msra.mxu0 1.0
        %209 = vmatprep.subr.mxu0 0.0
        %210 = vmatpush1.msra.mxu0 1.0
        %211 = vmatprep.subr.mxu0 0.0
        %212 = vmatpush1.msra.mxu0 1.0
        %213 = vmatprep.subr.mxu0 0.0
        %214 = vmatpush1.msra.mxu0 1.0
        %215 = vmatprep.subr.mxu0 0.0
        %216 = vmatpush1.msra.mxu0 1.0
        %217 = vmatprep.subr.mxu0 0.0
        %218 = vmatpush1.msra.mxu0 1.0
        %219 = vmatprep.subr.mxu0 0.0
        %220 = vmatpush1.msra.mxu0 1.0
        %221 = vmatprep.subr.mxu0 0.0
        %222 = vmatpush1.msra.mxu0 1.0
        %223 = vmatprep.subr.mxu0 0.0
        %224 = vmatpush1.msra.mxu0 1.0
        %225 = vmatprep.subr.mxu0 0.0
        %226 = vmatpush1.msra.mxu0 1.0
        %227 = vmatprep.subr.mxu0 0.0
        %228 = vmatpush1.msra.mxu0 1.0
        %229 = vmatprep.subr.mxu0 0.0
        %230 = vmatpush2.msra.mxu0 1.0
        %231 = vmatprep.subr.mxu0 0.0
        %232 = vmatpush2.msra.mxu0 1.0
        %233 = vmatprep.subr.mxu0 0.0
        %234 = vmatpush2.msra.mxu0 1.0
        %235 = vmatprep.subr.mxu0 0.0
        %236 = vmatpush2.msra.mxu0 1.0
        %237 = vmatprep.subr.mxu0 0.0
        %238 = vmatpush2.msra.mxu0 1.0
        %239 = vmatprep.subr.mxu0 0.0
        %240 = vmatpush2.msra.mxu0 1.0
        %241 = vmatprep.subr.mxu0 0.0
        %242 = vmatpush2.msra.mxu0 1.0
        %243 = vmatprep.subr.mxu0 0.0
        %244 = vmatpush2.msra.mxu0 1.0
        %245 = vmatprep.subr.mxu0 0.0
        %246 = vmatpush2.msra.mxu0 1.0
        %247 = vmatprep.subr.mxu0 0.0
        %248 = vmatpush2.msra.mxu0 1.0
        %249 = vmatprep.subr.mxu0 0.0
        %250 = vmatpush2.msra.mxu0 1.0
        %251 = vmatprep.subr.mxu0 0.0
        %252 = vmatpush2.msra.mxu0 1.0
        %253 = vmatprep.subr.mxu0 0.0
        %254 = vmatpush2.msra.mxu0 1.0
        %255 = vmatprep.subr.mxu0 0.0
        %256 = vmatpush2.msra.mxu0 1.0
        %257 = vmatprep.subr.mxu0 0.0
        %258 = vmatpush2.msra.mxu0 1.0
        %259 = vmatprep.subr.mxu0 0.0
        %260 = vmatpush2.msra.mxu0 1.0
        %261 = vmatprep.mubr.f32.mxu0 %v190
        %262 = vmatmul.mubr.f32.gmra.mxu0 %v189
        %v263 = vpop.f32.mrf.mxu0
        %v264 = vadd.f32 0.0, %v263
        %v265 = vpop.f32.mrf.mxu0
        %266 = vmatprep.mubr.f32.mxu0 %v192
        %267 = vmatmul.mubr.f32.gmra.mxu0 %v191
        %v268 = vpop.f32.mrf.mxu0
        %v269 = vadd.f32 0.0, %v268
        %v270 = vpop.f32.mrf.mxu0
        %271 = vmatprep.mubr.f32.mxu0 %v194
        %272 = vmatmul.mubr.f32.gmra.mxu0 %v193
        %v273 = vpop.f32.mrf.mxu0
        %v274 = vadd.f32 0.0, %v273
        %v275 = vpop.f32.mrf.mxu0
        %276 = vmatprep.mubr.f32.mxu0 %v196
        %277 = vmatmul.mubr.f32.gmra.mxu0 %v195
        %v278 = vpop.f32.mrf.mxu0
        %v279 = vadd.f32 0.0, %v278
        %v280 = vpop.f32.mrf.mxu0
        %281 = vdwg.mxu0
        %v282 = vmul.f32 %v264, 0.00390625
        %v283 = vmul.f32 %v269, 0.00390625
        %v284 = vmul.f32 %v274, 0.00390625
        %v285 = vmul.f32 %v279, 0.00390625
        %v286 = vld [vmem:[%s1] sm:$0x3]
        %vm287 = vcmask 261120
        %v289 = vsel %vm287, %v286, 0
        %291 = vmatprep.subr.mxu0 0.0
        %292 = vmatpush1.msra.mxu0 0.0
        %293 = vmatprep.subr.mxu0 0.0
        %294 = vmatpush1.msra.mxu0 0.0
        %295 = vmatprep.subr.mxu0 0.0
        %296 = vmatpush1.msra.mxu0 0.0
        %297 = vmatprep.subr.mxu0 0.0
        %298 = vmatpush1.msra.mxu0 0.0
        %299 = vmatprep.subr.mxu0 0.0
        %300 = vmatpush1.msra.mxu0 0.0
        %301 = vmatprep.subr.mxu0 0.0
        %302 = vmatpush1.msra.mxu0 0.0
        %303 = vmatprep.subr.mxu0 0.0
        %304 = vmatpush1.msra.mxu0 0.0
        %305 = vmatprep.subr.mxu0 0.0
        %306 = vmatpush1.msra.mxu0 0.0
        %307 = vmatprep.subr.mxu0 0.0
        %308 = vmatpush1.msra.mxu0 0.0
        %309 = vmatprep.subr.mxu0 0.0
        %310 = vmatpush1.msra.mxu0 0.0
        %311 = vmatprep.subr.mxu0 0.0
        %312 = vmatpush1.msra.mxu0 0.0
        %313 = vmatprep.subr.mxu0 0.0
        %314 = vmatpush1.msra.mxu0 0.0
        %315 = vmatprep.subr.mxu0 0.0
        %316 = vmatpush1.msra.mxu0 %v285
        %317 = vmatprep.subr.mxu0 0.0
        %318 = vmatpush1.msra.mxu0 %v284
        %319 = vmatprep.subr.mxu0 0.0
        %320 = vmatpush1.msra.mxu0 %v283
        %321 = vmatprep.subr.mxu0 0.0
        %322 = vmatpush1.msra.mxu0 %v282
        %323 = vmatprep.subr.mxu0 0.0
        %324 = vmatpush2.msra.mxu0 0.0
        %325 = vmatprep.subr.mxu0 0.0
        %326 = vmatpush2.msra.mxu0 0.0
        %327 = vmatprep.subr.mxu0 0.0
        %328 = vmatpush2.msra.mxu0 0.0
        %329 = vmatprep.subr.mxu0 0.0
        %330 = vmatpush2.msra.mxu0 0.0
        %331 = vmatprep.subr.mxu0 0.0
        %332 = vmatpush2.msra.mxu0 0.0
        %333 = vmatprep.subr.mxu0 0.0
        %334 = vmatpush2.msra.mxu0 0.0
        %335 = vmatprep.subr.mxu0 0.0
        %336 = vmatpush2.msra.mxu0 0.0
        %337 = vmatprep.subr.mxu0 0.0
        %338 = vmatpush2.msra.mxu0 0.0
        %339 = vmatprep.subr.mxu0 0.0
        %340 = vmatpush2.msra.mxu0 0.0
        %341 = vmatprep.subr.mxu0 0.0
        %342 = vmatpush2.msra.mxu0 0.0
        %343 = vmatprep.subr.mxu0 0.0
        %344 = vmatpush2.msra.mxu0 0.0
        %345 = vmatprep.subr.mxu0 0.0
        %346 = vmatpush2.msra.mxu0 0.0
        %347 = vmatprep.subr.mxu0 0.0
        %348 = vmatpush2.msra.mxu0 0.0
        %349 = vmatprep.subr.mxu0 0.0
        %350 = vmatpush2.msra.mxu0 0.0
        %351 = vmatprep.subr.mxu0 0.0
        %352 = vmatpush2.msra.mxu0 0.0
        %353 = vmatprep.subr.mxu0 0.0
        %354 = vmatpush2.msra.mxu0 0.0
        %355 = vmatprep.mubr.f32.mxu0 0.0
        %356 = vmatmul.mubr.f32.gmra.mxu0 %v289
        %v357 = vpop.f32.mrf.mxu0
        %v358 = vadd.f32 0.0, %v357
        %v359 = vpop.f32.mrf.mxu0
        %360 = vdwg.mxu0
        %v361 = vmax.f32 %v358, 0.0
        %v362 = vld [vmem:[%s2] sm:$0xff]
        %v363 = vld [vmem:[%s2 + $0x8] sm:$0xff]
        %v364 = vld [vmem:[%s2 + $0x10] sm:$0xff]
        %v365 = vld [vmem:[%s2 + $0x18] sm:$0xff]
        %vm366 = vcmask 15360
        %v368 = vsel %vm366, %v362, 0
        %v371 = vsel %vm366, %v363, 0
        %v374 = vsel %vm366, %v364, 0
        %v377 = vsel %vm366, %v365, 0
        %vm379 = vcmask 1041408
        %v381 = vsel %vm379, %v361, 0
        %383 = vmatprep.subr.mxu0 0.0
        %384 = vmatpush1.msra.mxu0 0.0
        %385 = vmatprep.subr.mxu0 0.0
        %386 = vmatpush1.msra.mxu0 0.0
        %387 = vmatprep.subr.mxu0 0.0
        %388 = vmatpush1.msra.mxu0 0.0
        %389 = vmatprep.subr.mxu0 0.0
        %390 = vmatpush1.msra.mxu0 0.0
        %391 = vmatprep.subr.mxu0 0.0
        %392 = vmatpush1.msra.mxu0 0.0
        %393 = vmatprep.subr.mxu0 0.0
        %394 = vmatpush1.msra.mxu0 0.0
        %395 = vmatprep.subr.mxu0 0.0
        %396 = vmatpush1.msra.mxu0 0.0
        %397 = vmatprep.subr.mxu0 0.0
        %398 = vmatpush1.msra.mxu0 0.0
        %399 = vmatprep.subr.mxu0 0.0
        %400 = vmatpush1.msra.mxu0 0.0
        %401 = vmatprep.subr.mxu0 0.0
        %402 = vmatpush1.msra.mxu0 0.0
        %403 = vmatprep.subr.mxu0 0.0
        %404 = vmatpush1.msra.mxu0 0.0
        %405 = vmatprep.subr.mxu0 0.0
        %406 = vmatpush1.msra.mxu0 0.0
        %407 = vmatprep.subr.mxu0 0.0
        %408 = vmatpush1.msra.mxu0 0.0
        %409 = vmatprep.subr.mxu0 0.0
        %410 = vmatpush1.msra.mxu0 0.0
        %411 = vmatprep.subr.mxu0 0.0
        %412 = vmatpush1.msra.mxu0 0.0
        %413 = vmatprep.subr.mxu0 0.0
        %414 = vmatpush1.msra.mxu0 %v381
        %415 = vmatprep.subr.mxu0 0.0
        %416 = vmatpush2.msra.mxu0 0.0
        %417 = vmatprep.subr.mxu0 0.0
        %418 = vmatpush2.msra.mxu0 0.0
        %419 = vmatprep.subr.mxu0 0.0
        %420 = vmatpush2.msra.mxu0 0.0
        %421 = vmatprep.subr.mxu0 0.0
        %422 = vmatpush2.msra.mxu0 0.0
        %423 = vmatprep.subr.mxu0 0.0
        %424 = vmatpush2.msra.mxu0 0.0
        %425 = vmatprep.subr.mxu0 0.0
        %426 = vmatpush2.msra.mxu0 0.0
        %427 = vmatprep.subr.mxu0 0.0
        %428 = vmatpush2.msra.mxu0 0.0
        %429 = vmatprep.subr.mxu0 0.0
        %430 = vmatpush2.msra.mxu0 0.0
        %431 = vmatprep.subr.mxu0 0.0
        %432 = vmatpush2.msra.mxu0 0.0
        %433 = vmatprep.subr.mxu0 0.0
        %434 = vmatpush2.msra.mxu0 0.0
        %435 = vmatprep.subr.mxu0 0.0
        %436 = vmatpush2.msra.mxu0 0.0
        %437 = vmatprep.subr.mxu0 0.0
        %438 = vmatpush2.msra.mxu0 0.0
        %439 = vmatprep.subr.mxu0 0.0
        %440 = vmatpush2.msra.mxu0 0.0
        %441 = vmatprep.subr.mxu0 0.0
        %442 = vmatpush2.msra.mxu0 0.0
        %443 = vmatprep.subr.mxu0 0.0
        %444 = vmatpush2.msra.mxu0 0.0
        %445 = vmatprep.subr.mxu0 0.0
        %446 = vmatpush2.msra.mxu0 0.0
        %447 = vmatprep.mubr.f32.mxu0 0.0
        %448 = vmatmul.mubr.f32.gmra.mxu0 %v368
        %v449 = vpop.f32.mrf.mxu0
        %v450 = vadd.f32 0.0, %v449
        %v451 = vpop.f32.mrf.mxu0
        %452 = vmatprep.mubr.f32.mxu0 0.0
        %453 = vmatmul.mubr.f32.gmra.mxu0 %v371
        %v454 = vpop.f32.mrf.mxu0
        %v455 = vadd.f32 0.0, %v454
        %v456 = vpop.f32.mrf.mxu0
        %457 = vmatprep.mubr.f32.mxu0 0.0
        %458 = vmatmul.mubr.f32.gmra.mxu0 %v374
        %v459 = vpop.f32.mrf.mxu0
        %v460 = vadd.f32 0.0, %v459
        %v461 = vpop.f32.mrf.mxu0
        %462 = vmatprep.mubr.f32.mxu0 0.0
        %463 = vmatmul.mubr.f32.gmra.mxu0 %v377
        %v464 = vpop.f32.mrf.mxu0
        %v465 = vadd.f32 0.0, %v464
        %v466 = vpop.f32.mrf.mxu0
        %467 = vdwg.mxu0
        %v468 = vxor.u32 %v450, 2147483648
        %v469 = vxor.u32 %v455, 2147483648
        %v470 = vxor.u32 %v460, 2147483648
        %v471 = vxor.u32 %v465, 2147483648
        %v472 = vmul.f32 %v468, 1.442695
        %v473 = vpow.pop %v472
        %v474 = vmul.f32 %v469, 1.442695
        %v475 = vpow.pop %v474
        %v476 = vmul.f32 %v470, 1.442695
        %v477 = vpow.pop %v476
        %v478 = vmul.f32 %v471, 1.442695
        %v479 = vpow.pop %v478
        %v480 = vadd.f32 %v473, 1.0
        %v481 = vadd.f32 %v475, 1.0
        %v482 = vadd.f32 %v477, 1.0
        %v483 = vadd.f32 %v479, 1.0
        %v484 = vrcp.pop %v480
        %v485 = vmul.f32 1.0, %v484
        %v486 = vrcp.pop %v481
        %v487 = vmul.f32 1.0, %v486
        %v488 = vrcp.pop %v482
        %v489 = vmul.f32 1.0, %v488
        %v490 = vrcp.pop %v483
        %v491 = vmul.f32 1.0, %v490
        %493 = vset.pattern.permute.xlu0 0
        %494 = vperm.xlu0 %493, %v485
        %v495 = vpop.permute.xlu0 %494
        %498 = vset.pattern.permute.xlu0 0
        %499 = vperm.xlu0 %498, %v487
        %v500 = vpop.permute.xlu0 %499
        %503 = vset.pattern.permute.xlu0 0
        %504 = vperm.xlu0 %503, %v489
        %v505 = vpop.permute.xlu0 %504
        %508 = vset.pattern.permute.xlu0 0
        %509 = vperm.xlu0 %508, %v491
        %v510 = vpop.permute.xlu0 %509
        %v512 = vmul.f32 %v189, %v495
        %v513 = vmul.f32 %v190, %v495
        %v514 = vmul.f32 %v191, %v500
        %v515 = vmul.f32 %v192, %v500
        %v516 = vmul.f32 %v193, %v505
        %v517 = vmul.f32 %v194, %v505
        %v518 = vmul.f32 %v195, %v510
        %v519 = vmul.f32 %v196, %v510
        %520 = vst [vmem:[%s188] sm:$0xff] %v512
        %521 = vst [vmem:[%s188 + $0x8] sm:$0xff] %v513
        %522 = vst [vmem:[%s188 + $0x10] sm:$0xff] %v514
        %523 = vst [vmem:[%s188 + $0x18] sm:$0xff] %v515
        %524 = vst [vmem:[%s188 + $0x20] sm:$0xff] %v516
        %525 = vst [vmem:[%s188 + $0x28] sm:$0xff] %v517
        %526 = vst [vmem:[%s188 + $0x30] sm:$0xff] %v518
        %527 = vst [vmem:[%s188 + $0x38] sm:$0xff] %v519
        %s528 = sand.u32 %s96, 1
        %s529 = scalar_lea.sflag [#allocation4], %s528
        %s530 = sand.u32 %s96, 1
        %s531 = smul.addr %s530, 64
        %s532 = scalar_lea.vmem [#allocation5], %s531
        // Predicated region
        $region37: #{tpu_custom_call.1} parent=31 // pred_check
          %p533 = pneg %p106
        $region38: #{tpu_custom_call.1} parent=31 // pred_check_branch
          %535 = sbr.rel (%p533) target = $region40
        $region39: #{tpu_custom_call.1} parent=31 // pred_region
          %s537 = ssub.s32 1024, 1024
          %538 = vsyncadd %s529, %s537
          %s539 = smul.addr %s20, 8
          %s540 = smul.addr %s539, 128
          %s541 = scalar_lea.hbm %s3, %s540
          %s542 = sshll.u32 %s532, 4
          %s543 = int_to_ptr.vmem [resolvable:$true] %s542
          %548 = dma.vmem_to_hbm [thread:$0]  %s543, 1024, %s541, %s529, 256, 256, 16
        $region40: #{tpu_custom_call.1} parent=31 // pred_fallthru
          _
      $region32: #{tpu_custom_call.1} parent=5 // pred_fallthru
        _
      %p549 = scmp.le.s32.totalorder 2, %s15
      // Predicated region
      $region41: #{tpu_custom_call.1} parent=5 // pred_check
        %p550 = pneg %p549
      $region42: #{tpu_custom_call.1} parent=5 // pred_check_branch
        %552 = sbr.rel (%p550) target = $region44
      $region43: #{tpu_custom_call.1} parent=5 // pred_region
        %s553 = ssub.s32 %s15, 2
        // Predicated region
        $region45: #{tpu_custom_call.1} parent=43 // pred_check
          %p554 = pneg %p112
        $region46: #{tpu_custom_call.1} parent=43 // pred_check_branch
          %556 = sbr.rel (%p554) target = $region48
        $region47: #{tpu_custom_call.1} parent=43 // pred_region
          %s557 = sand.u32 %s97, 1
          %s558 = scalar_lea.sflag [#allocation4], %s557
          %s559 = sand.u32 %s97, 1
          %s560 = smul.addr %s559, 64
          %s561 = scalar_lea.vmem [#allocation5], %s560
          %562 = dma.done %s558, 1024
        $region48: #{tpu_custom_call.1} parent=43 // pred_fallthru
          _
      $region44: #{tpu_custom_call.1} parent=5 // pred_fallthru
        _
    $region6: #{tpu_custom_call.1} parent=1 // loop_footer
      %s19 = sadd.s32 1, %s15
    $region7: #{tpu_custom_call.1} parent=1 // loop_footer_branch
      %14 = sbr.rel target = $region3
    $region8: #{tpu_custom_call.1} parent=1 // loop_exit
      _
    %563 = vsyncpa [#allocation3], 1
    %s564 = scalar_lea.sflag [#allocation3], 1
    %565 = vsyncpa %s564, 1
    %566 = vsyncpa [#allocation4], 1
    %s567 = scalar_lea.sflag [#allocation4], 1
    %568 = vsyncpa %s567, 1

</llo_original>
